<compile_context>
chip_gen: v5e
topology: v5e:2x2
jax: 0.10.0
libtpu: 0.0.40
codegen_flags: <defaults>
</compile_context>

<pallas_src>
import jax
import jax.numpy as jnp
from jax.experimental import pallas as pl
from jax.experimental.pallas import tpu as pltpu

# Downstream consumers should read `x` starting at this token offset instead of
# expecting a materialized x[:, 2:] array.
TOKEN_OFFSET = 2


def _scale_head_kernel(x01_ref, w_ref, b_ref, out_ref):
    # x01_ref: (bb, 2, D) VMEM -- token 0 (shift head) and token 1 (scale head).
    # w_ref:   (2, D)     VMEM -- row 0: shift weight, row 1: scale weight.
    # b_ref:   (1, 2)     VMEM -- [[shift_bias, scale_bias]].
    # out_ref: (bb, 2)    VMEM -- [:, 0] = exp(shift), [:, 1] = exp(scale).
    x = x01_ref[...].astype(jnp.float32)            # (bb, 2, D)
    w = w_ref[...].astype(jnp.float32)              # (2, D)

    # Fused contraction for both heads: VPU multiply + lane reduce (D is small,
    # so this beats driving the MXU with 1-column matmuls).  Sublane occupancy
    # of the (bb, 2, D) slab is second-order for this size (per review).
    s = jnp.sum(x * w[None, :, :], axis=-1)         # (bb, 2)

    # Single full-block store; bias row broadcasts over the batch tile.
    out_ref[...] = jnp.exp(s + b_ref[...]).astype(out_ref.dtype)


def pack_scale_head_params(w_shift, b_shift, w_scale, b_scale):
    """One-time packing of the two nn.Linear(embed_dim, 1) heads.

    w_shift, w_scale: (1, D)  (PyTorch nn.Linear weight layout); b_*: (1,).
    Returns w: (2, D) f32, b: (1, 2) f32.  Call once at model init, not per step.
    """
    w = jnp.concatenate([w_shift, w_scale], axis=0).astype(jnp.float32)       # (2, D)
    b = jnp.stack([b_shift[0], b_scale[0]]).reshape(1, 2).astype(jnp.float32)  # (1, 2)
    return w, b


def _pick_batch_tile(B, D, vmem_budget_bytes=8 << 20):
    """Biggest batch tile that fits a conservative VMEM budget.

    Per grid step the x01 input block is double-buffered: 2 * bb * 2 * D * 4 B
    (f32 worst case).  ~8 MiB keeps us comfortably inside the scoped VMEM
    default on every generation (v7x: 32 MiB scoped / 64 MiB physical; v5e/v6e
    could take ~2x more).  Output block is (bb, 2): bb must equal B or be a
    multiple of 8 -- the cap is rounded down to a multiple of 8 so a padded
    partial tail block (grid = cdiv(B, bb)) stays legal.
    """
    per_row_bytes = 2 * 2 * D * 4            # double-buffered, 2 tokens, f32
    cap = max(8, (vmem_budget_bytes // per_row_bytes) // 8 * 8)
    if B <= cap:
        return B                              # single grid step (preferred)
    return cap


@jax.jit
def scale_head_forward(x, w, b):
    """x: (B, N, D); w: (2, D) packed weights; b: (1, 2) packed biases.

    Returns shift_scale: (B, 1, 2).

    NOTE: the torch module also returns x[:, 2:].  Per the performance review
    that (B, N-2, D) HBM copy is the dominant cost of this op, so it is NOT
    materialized here -- consumers should read `x` with token offset
    TOKEN_OFFSET (e.g. fold the +2 into the next layer's BlockSpec index_map).
    """
    B, N, D = x.shape
    assert N >= TOKEN_OFFSET

    # Only tokens 0 and 1 feed the heads.  This tiny (B, 2, D) slice is the
    # only HBM the op touches; it would disappear entirely if fused into the
    # preceding decoder-layer kernel (see TODO at top).
    x01 = x[:, :TOKEN_OFFSET, :]

    bb = _pick_batch_tile(B, D)
    num_steps = pl.cdiv(B, bb)
    # 2-TC split only when there is actually >1 step's worth of work (v7x);
    # otherwise keep the whole (tiny) op on a single TensorCore.
    semantics = ("parallel",) if num_steps > 1 else ("arbitrary",)

    out = pl.pallas_call(
        _scale_head_kernel,
        out_shape=jax.ShapeDtypeStruct((B, 2), jnp.float32),
        grid=(num_steps,),
        in_specs=[
            pl.BlockSpec((bb, 2, D), lambda i: (i, 0, 0)),
            pl.BlockSpec((2, D), lambda i: (0, 0)),      # weights stay resident
            pl.BlockSpec((1, 2), lambda i: (0, 0)),      # bias row stays resident
        ],
        out_specs=pl.BlockSpec((bb, 2), lambda i: (i, 0)),
        compiler_params=pltpu.CompilerParams(dimension_semantics=semantics),
    )(x01, w, b)

    return out.reshape(B, 1, 2)   # matches torch.cat((B,1,1),(B,1,1), dim=-1)


def scale_head_forward_torch_compat(x, w, b):
    """Exact-parity return (x[:, 2:], shift_scale) with the original module.

    WARNING: reintroduces the (B, N-2, D) HBM copy the performance review
    flags; prefer scale_head_forward + TOKEN_OFFSET in real pipelines.
    """
    shift_scale = scale_head_forward(x, w, b)
    return x[:, TOKEN_OFFSET:], shift_scale


def _reference(x, w_shift, b_shift, w_scale, b_scale):
    pred_shift = jnp.exp(x[:, 0:1] @ w_shift.T + b_shift)             # (B, 1, 1)
    pred_scale = jnp.exp(x[:, 1:2] @ w_scale.T + b_scale)             # (B, 1, 1)
    shift_scale = jnp.concatenate([pred_shift, pred_scale], axis=-1)  # (B, 1, 2)
    return x[:, 2:], shift_scale


if __name__ == "__main__":
    B, N, D = 2, 8, 32  # batch=2, seq=8 tokens, embed_dim=32

    key = jax.random.PRNGKey(0)
    kx, kws, kbs, kwc, kbc = jax.random.split(key, 5)

    x = jax.random.normal(kx, (B, N, D), dtype=jnp.float32)

    # Deterministic parameter init (mirrors nn.Linear(embed_dim, 1) shapes).
    bound = 1.0 / (D ** 0.5)
    w_shift = jax.random.uniform(kws, (1, D), minval=-bound, maxval=bound)
    b_shift = jax.random.uniform(kbs, (1,), minval=-bound, maxval=bound)
    w_scale = jax.random.uniform(kwc, (1, D), minval=-bound, maxval=bound)
    b_scale = jax.random.uniform(kbc, (1,), minval=-bound, maxval=bound)

    # Hoisted one-time packing (model-init time, not per forward).
    w, b = pack_scale_head_params(w_shift, b_shift, w_scale, b_scale)

    # Hot path: only shift_scale is computed; x is consumed downstream with
    # TOKEN_OFFSET instead of materializing x[:, 2:].
    shift_scale = scale_head_forward(x, w, b)
    jax.block_until_ready(shift_scale)

    # Correctness check against a pure-JAX reference.
    ref_rest, ref_ss = _reference(x, w_shift, b_shift, w_scale, b_scale)
    assert shift_scale.shape == (B, 1, 2)
    assert jnp.allclose(shift_scale, ref_ss, rtol=1e-5, atol=1e-5)

    # Semantic parity with the torch return signature (compat path).
    x_rest, shift_scale2 = scale_head_forward_torch_compat(x, w, b)
    jax.block_until_ready((x_rest, shift_scale2))
    assert x_rest.shape == (B, N - TOKEN_OFFSET, D)
    assert jnp.allclose(x_rest, ref_rest)
    assert jnp.allclose(shift_scale2, ref_ss, rtol=1e-5, atol=1e-5)

    print("KERNEL_OK")
</pallas_src>

<mosaic_0001>
module attributes {stable_mosaic.version = 11 : i64} {
  func.func @_scale_head_kernel(%arg0: i32, %arg1: memref<2x2x32xf32, #tpu.memory_space<vmem>>, %arg2: memref<2x32xf32, #tpu.memory_space<vmem>>, %arg3: memref<1x2xf32, #tpu.memory_space<vmem>>, %arg4: memref<2x2xf32, #tpu.memory_space<vmem>>) attributes {dimension_semantics = [#tpu.dimension_semantics<arbitrary>], iteration_bounds = array<i64: 1>, scalar_prefetch = 0 : i64, scratch_operands = 0 : i64, tpu.core_type = #tpu.core_type<tc>, window_params = [{transform_indices = @transform_0, window_bounds = array<i64: 2, 2, 32>}, {pipeline_mode = #tpu.pipeline_mode<synchronous>, transform_indices = @transform_1, window_bounds = array<i64: 2, 32>}, {pipeline_mode = #tpu.pipeline_mode<synchronous>, transform_indices = @transform_2, window_bounds = array<i64: 1, 2>}, {transform_indices = @transform_3, window_bounds = array<i64: 2, 2>}]} {
    %c0 = arith.constant 0 : index
    %c0_0 = arith.constant 0 : index
    %c0_1 = arith.constant 0 : index
    %0 = vector.load %arg1[%c0, %c0_0, %c0_1] : memref<2x2x32xf32, #tpu.memory_space<vmem>>, vector<2x2x32xf32>
    %c0_2 = arith.constant 0 : index
    %c0_3 = arith.constant 0 : index
    %1 = vector.load %arg2[%c0_2, %c0_3] : memref<2x32xf32, #tpu.memory_space<vmem>>, vector<2x32xf32>
    %2 = vector.shape_cast %1 : vector<2x32xf32> to vector<1x2x32xf32>
    %3 = vector.broadcast %2 : vector<1x2x32xf32> to vector<2x2x32xf32>
    %4 = arith.mulf %0, %3 : vector<2x2x32xf32>
    %cst = arith.constant dense<0.000000e+00> : vector<2x2xf32>
    %5 = vector.multi_reduction <add>, %4, %cst [2] : vector<2x2x32xf32> to vector<2x2xf32>
    %c0_4 = arith.constant 0 : index
    %c0_5 = arith.constant 0 : index
    %6 = vector.load %arg3[%c0_4, %c0_5] : memref<1x2xf32, #tpu.memory_space<vmem>>, vector<1x2xf32>
    %7 = vector.broadcast %6 : vector<1x2xf32> to vector<2x2xf32>
    %8 = arith.addf %5, %7 : vector<2x2xf32>
    %9 = math.exp %8 : vector<2x2xf32>
    %c0_6 = arith.constant 0 : index
    %c0_7 = arith.constant 0 : index
    %10 = vector.load %arg4[%c0_6, %c0_7] : memref<2x2xf32, #tpu.memory_space<vmem>>, vector<2x2xf32>
    tpu.vector_store %arg4[%c0_6, %c0_7], %9 {strides = array<i32>} : memref<2x2xf32, #tpu.memory_space<vmem>>, vector<2x2xf32>,
    return
  }
  func.func @transform_0(%arg0: i32) -> (i32, i32, i32) {
    %c0_i32 = arith.constant 0 : i32
    %c0_i32_0 = arith.constant 0 : i32
    %c0_i32_1 = arith.constant 0 : i32
    return %arg0, %c0_i32, %c0_i32_0 : i32, i32, i32
  }
  func.func @transform_1(%arg0: i32) -> (i32, i32) {
    %c0_i32 = arith.constant 0 : i32
    %c0_i32_0 = arith.constant 0 : i32
    %c0_i32_1 = arith.constant 0 : i32
    return %c0_i32, %c0_i32_0 : i32, i32
  }
  func.func @transform_2(%arg0: i32) -> (i32, i32) {
    %c0_i32 = arith.constant 0 : i32
    %c0_i32_0 = arith.constant 0 : i32
    %c0_i32_1 = arith.constant 0 : i32
    return %c0_i32, %c0_i32_0 : i32, i32
  }
  func.func @transform_3(%arg0: i32) -> (i32, i32) {
    %c0_i32 = arith.constant 0 : i32
    %c0_i32_0 = arith.constant 0 : i32
    return %arg0, %c0_i32 : i32, i32
  }
}

</mosaic_0001>

<llo_original>
// kernel: scale_head_forward.1
$region0: #{scale_head_forward.1}
  #allocation0 [shape = 'u32[]', space=smem, size = 0x4, offset = 0x4, fixed_abs, tag = 'smem constant byte address 0x4 - core index']
  #allocation1 [shape = 'u32[72,128]{1,0:T(1,128)}', space=vmem, size = 0x9000, scoped, tag = 'internal scratch']
  %s0 = inlined_call_operand.vmem [shape: f32[2,2,32], index: 0, kind: input, shape index: {}]
  %s1 = inlined_call_operand.vmem [shape: f32[2,32], index: 1, kind: input, shape index: {}]
  %s2 = inlined_call_operand.vmem [shape: f32[1,2], index: 2, kind: input, shape index: {}]
  %s3 = inlined_call_operand.hbm [shape: f32[2,2], index: 3, kind: output, shape index: {}]
  %s4 = sld [smem:[#allocation0]]
  $region22: #{scale_head_forward.1} parent=0
    _
  %s6 = ssub.s32 1, %s4
  %s7 = scalar_select 0, %s6, %s4
  $region1: #{scale_head_forward.1} parent=0
    #allocation2 [shape = 'u8[1024]{0}', space=vmem, size = 0x400, scoped, tag = 'output window, operand 0, single buffered']
    #allocation3 [shape = 's32[1]{0}', space=sflag, size = 0x4, scoped, tag = 'scoped memory for scale_head_forward.1']
    %8 = vsyncpa [#allocation3], 0
    // Predicated region
    $region2: #{scale_head_forward.1} parent=1 // pred_check
      _
    $region3: #{scale_head_forward.1} parent=1 // pred_check_branch
      %10 = sbr.rel (0) target = $region5
    $region4: #{scale_head_forward.1} parent=1 // pred_region
      _
    $region5: #{scale_head_forward.1} parent=1 // pred_fallthru
      _
    // Predicated region
    $region6: #{scale_head_forward.1} parent=1 // pred_check
      _
    $region7: #{scale_head_forward.1} parent=1 // pred_check_branch
      %12 = sbr.rel (0) target = $region9
    $region8: #{scale_head_forward.1} parent=1 // pred_region
      _
    $region9: #{scale_head_forward.1} parent=1 // pred_fallthru
      _
    // Predicated region
    $region10: #{scale_head_forward.1} parent=1 // pred_check
      _
    $region11: #{scale_head_forward.1} parent=1 // pred_check_branch
      %14 = sbr.rel (0) target = $region13
    $region12: #{scale_head_forward.1} parent=1 // pred_region
      _
    $region13: #{scale_head_forward.1} parent=1 // pred_fallthru
      _
    %v15 = vld [vmem:[%s0] sm:$0x3]
    %v16 = vld [vmem:[%s0 + $0x2] sm:$0x3]
    %v17 = vld [vmem:[%s1] sm:$0x3]
    %v18 = vmul.f32 %v15, %v17
    %v19 = vmul.f32 %v16, %v17
    %vm20 = vcmask 254976
    %v21 = vsel %vm20, %v18, 0.0
    %22 = vadd.xlane.f32.xlu0 %v21
    %v23 = vpop.xlane.xlu0 %22
    %v24 = vsel %vm20, %v19, 0.0
    %25 = vadd.xlane.f32.xlu0 %v24
    %v26 = vpop.xlane.xlu0 %25
    %v27 = vld [vmem:[%s2] sm:$0x1]
    %v29 = vperm.slane %v27, 0
    %v30 = vlaneseq
    %v31 = vshrl.u32 %v30, 7
    %33 = vset.pattern.permute.xlu0 %v31
    %34 = vperm.xlu0 %33, %v29
    %v35 = vpop.permute.xlu0 %34
    %v37 = vadd.f32 %v23, %v35
    %v38 = vadd.f32 %v26, %v35
    %v39 = vmul.f32 %v37, 1.442695
    %v40 = vpow.pop %v39
    %v41 = vmul.f32 %v38, 1.442695
    %v42 = vpow.pop %v41
    %45 = vset.pattern.permute.xlu0 0
    %46 = vperm.xlu0 %45, %v40
    %v47 = vpop.permute.xlu0 %46
    %48 = vset.pattern.permute.xlu0 0
    %49 = vperm.xlu0 %48, %v42
    %v50 = vpop.permute.xlu0 %49
    %v51 = vlaneseq
    %v52 = vand.u32 %v51, 127
    %v53 = vperm.slane %v47, %v52
    %v54 = vperm.slane %v50, %v52
    %vm55 = vcmask 1041409
    %v56 = vsel %vm55, %v54, %v53
    %vm58 = vcmask 9216
    %59 = vst.msk [vmem:[#allocation2] sm:$0x3] %vm58, %v56
    // Predicated region
    $region14: #{scale_head_forward.1} parent=1 // pred_check
      _
    $region15: #{scale_head_forward.1} parent=1 // pred_check_branch
      %61 = sbr.rel (0) target = $region17
    $region16: #{scale_head_forward.1} parent=1 // pred_region
      %63 = vsyncadd [#allocation3], 0
      %s65 = sshll.u32 [#allocation2], 4
      %s66 = int_to_ptr.vmem [resolvable:$true] %s65
      %s67 = sshll.u32 %s3, 4
      %s68 = int_to_ptr.hbm [resolvable:$true] %s67
      %70 = dma.vmem_to_hbm [thread:$0]  %s66, 32, %s68, [#allocation3]
    $region17: #{scale_head_forward.1} parent=1 // pred_fallthru
      _
    // Predicated region
    $region18: #{scale_head_forward.1} parent=1 // pred_check
      _
    $region19: #{scale_head_forward.1} parent=1 // pred_check_branch
      %72 = sbr.rel (0) target = $region21
    $region20: #{scale_head_forward.1} parent=1 // pred_region
      %74 = dma.done [#allocation3], 32
    $region21: #{scale_head_forward.1} parent=1 // pred_fallthru
      _
    %75 = vsyncpa [#allocation3], 1

</llo_original>
